<compile_context>
chip_gen: v5e
topology: v5e:2x2
jax: 0.10.0
libtpu: 0.0.40
codegen_flags: <defaults>
</compile_context>

<pallas_src>
import functools

import jax
import jax.numpy as jnp
from jax.experimental import pallas as pl
from jax.experimental.pallas import tpu as pltpu


_LANE = 128
_SUBLANE = 8
# Total accounted VMEM per pipeline stage set (2x input buffer + 2x output
# buffer [+ accumulator]), kept comfortably under the scoped limit below.
_VMEM_BUDGET_BYTES = 24 * 1024 * 1024
_VMEM_LIMIT_BYTES = 32 * 1024 * 1024  # <= default/physical on v5e, v6e, v7x


def _round_up(x, m):
    return -(-x // m) * m


def _choose_blocks(rows, hw, in_itemsize, out_itemsize):
    """Pick (row_block, hw_block) sized to the VMEM budget."""
    hw_pad = _round_up(hw, _LANE)  # lane padding of the input tile in VMEM
    # Single-spatial-tile path bytes per row of a block:
    #   2 x input buffer (lane padded) + 2 x output buffer ((row, 1) pads to
    #   128 lanes). No accumulator on this path.
    per_row = 2 * hw_pad * in_itemsize + 2 * _LANE * out_itemsize
    if _SUBLANE * per_row <= _VMEM_BUDGET_BYTES:
        # Whole spatial extent fits in one block for at least 8 rows.
        hw_block = hw
        row_block = (_VMEM_BUDGET_BYTES // per_row) // _SUBLANE * _SUBLANE
        row_block = max(_SUBLANE, row_block)
        if row_block >= rows:
            row_block = rows
        return row_block, hw_block
    # Spatial axis too large even for an 8-row sliver: tile hw as well.
    row_block = rows if rows < _SUBLANE else _SUBLANE
    rb_pad = _round_up(row_block, _SUBLANE)
    # 2 x output buffer + f32 accumulator (all pad to 128 lanes).
    fixed = rb_pad * (2 * _LANE * out_itemsize + _LANE * 4)
    hw_budget = (_VMEM_BUDGET_BYTES - fixed) // (2 * rb_pad * in_itemsize)
    hw_block = max(_LANE, hw_budget // _LANE * _LANE)
    hw_block = min(hw_block, hw)
    return row_block, hw_block


def _gap_kernel_single(x_ref, o_ref, *, inv_hw):
    # One spatial tile: reduce the full H*W extent of this row block.
    s = jnp.sum(x_ref[...], axis=-1, dtype=jnp.float32, keepdims=True)
    o_ref[...] = (s * inv_hw).astype(o_ref.dtype)


def _gap_kernel_acc(x_ref, o_ref, acc_ref, *, hw, hw_block, inv_hw, needs_mask):
    k = pl.program_id(1)
    nk = pl.num_programs(1)

    @pl.when(k == 0)
    def _init():
        acc_ref[...] = jnp.zeros_like(acc_ref)

    def _accumulate_full():
        # f32 accumulation without a separate f32 copy of the tile.
        acc_ref[...] += jnp.sum(
            x_ref[...], axis=-1, dtype=jnp.float32, keepdims=True)

    if needs_mask:
        # Only the last spatial tile is partial: gate the iota/select mask
        # onto that step so every full tile runs the cheap path.
        @pl.when(k < nk - 1)
        def _full():
            _accumulate_full()

        @pl.when(k == nk - 1)
        def _partial():
            x = x_ref[...]
            lane = jax.lax.broadcasted_iota(jnp.int32, x.shape, 1)
            x = jnp.where(k * hw_block + lane < hw, x, jnp.zeros_like(x))
            acc_ref[...] += jnp.sum(x, axis=-1, dtype=jnp.float32,
                                    keepdims=True)
    else:
        _accumulate_full()

    @pl.when(k == nk - 1)
    def _finalize():
        o_ref[...] = (acc_ref[...] * inv_hw).astype(o_ref.dtype)


def global_avg_pool2d(x, *, row_block=None, hw_block=None):
    """x: (N, C, H, W) -> (N, C, 1, 1), mean over H*W (matches PyTorch)."""
    n, c, h, w = x.shape
    rows = n * c
    hw = h * w
    x2d = x.reshape(rows, hw)
    out_dtype = x.dtype
    out_itemsize = jnp.dtype(out_dtype).itemsize

    auto_rb, auto_hb = _choose_blocks(rows, hw, x.dtype.itemsize, out_itemsize)
    if row_block is None:
        row_block = auto_rb
    if hw_block is None:
        hw_block = auto_hb
    # BlockSpec constraints: second-minor dim multiple of 8 or full extent;
    # minor dim multiple of 128 or full extent.
    assert row_block == rows or row_block % _SUBLANE == 0, row_block
    assert hw_block == hw or hw_block % _LANE == 0, hw_block

    grid_rows = pl.cdiv(rows, row_block)
    grid_hw = pl.cdiv(hw, hw_block)
    inv_hw = 1.0 / float(hw)

    # Advisory cost: one add per element streamed from HBM; tiny writeback.
    cost = pl.CostEstimate(
        flops=rows * hw,
        transcendentals=0,
        bytes_accessed=rows * hw * x.dtype.itemsize + rows * out_itemsize)

    if grid_hw == 1:
        # Fast path: whole spatial extent per block, 1-D grid over row tiles.
        kernel = functools.partial(_gap_kernel_single, inv_hw=inv_hw)
        grid_spec = pltpu.PrefetchScalarGridSpec(
            num_scalar_prefetch=0,
            grid=(grid_rows,),
            in_specs=[pl.BlockSpec((row_block, hw), lambda i: (i, 0))],
            out_specs=pl.BlockSpec((row_block, 1), lambda i: (i, 0)),
            scratch_shapes=(),
        )
        dim_sem = ("parallel",)
    else:
        # Huge spatial extent: tile hw as the innermost reduction axis.
        kernel = functools.partial(
            _gap_kernel_acc, hw=hw, hw_block=hw_block, inv_hw=inv_hw,
            needs_mask=(hw % hw_block != 0))
        grid_spec = pltpu.PrefetchScalarGridSpec(
            num_scalar_prefetch=0,
            grid=(grid_rows, grid_hw),
            in_specs=[pl.BlockSpec((row_block, hw_block),
                                   lambda i, k: (i, k))],
            out_specs=pl.BlockSpec((row_block, 1), lambda i, k: (i, 0)),
            scratch_shapes=[pltpu.VMEM((row_block, 1), jnp.float32)],
        )
        dim_sem = ("parallel", "arbitrary")

    out2d = pl.pallas_call(
        kernel,
        out_shape=jax.ShapeDtypeStruct((rows, 1), out_dtype),
        grid_spec=grid_spec,
        compiler_params=pltpu.CompilerParams(
            dimension_semantics=dim_sem,
            vmem_limit_bytes=_VMEM_LIMIT_BYTES,
        ),
        cost_estimate=cost,
    )(x2d)

    return out2d.reshape(n, c, 1, 1)


if __name__ == "__main__":
    key = jax.random.PRNGKey(0)
    k0, k1, k2 = jax.random.split(key, 3)

    # Main example (auto-tiled, single-spatial-tile fast path).
    x = jax.random.normal(k0, (2, 4, 16, 16), dtype=jnp.float32)
    out = global_avg_pool2d(x)
    jax.block_until_ready(out)
    ref = jnp.mean(x.reshape(2, 4, -1), axis=2).reshape(2, 4, 1, 1)
    assert out.shape == (2, 4, 1, 1), out.shape
    assert jnp.allclose(out, ref, atol=1e-5, rtol=1e-5), "mismatch vs reference"

    # Exercise the tiled-reduction path on a small shape: partial (cdiv) row
    # tile, spatial-axis tiling with a masked partial last tile, and the f32
    # accumulator with pl.when init/finalize.
    x2 = jax.random.normal(k1, (3, 4, 12, 12), dtype=jnp.float32)
    out2 = global_avg_pool2d(x2, row_block=8, hw_block=128)
    jax.block_until_ready(out2)
    ref2 = jnp.mean(x2.reshape(3, 4, -1), axis=2).reshape(3, 4, 1, 1)
    assert out2.shape == (3, 4, 1, 1), out2.shape
    assert jnp.allclose(out2, ref2, atol=1e-5, rtol=1e-5), "mismatch (tiled path)"

    # bf16 input: f32 accumulation inside the kernel, bf16 output.
    x3 = jax.random.normal(k2, (2, 4, 16, 16), dtype=jnp.bfloat16)
    out3 = global_avg_pool2d(x3)
    jax.block_until_ready(out3)
    ref3 = jnp.mean(x3.astype(jnp.float32).reshape(2, 4, -1), axis=2)
    assert out3.dtype == jnp.bfloat16, out3.dtype
    assert jnp.allclose(out3.astype(jnp.float32).reshape(2, 4), ref3,
                        atol=2e-2, rtol=2e-2), "mismatch (bf16)"

    print("KERNEL_OK")
</pallas_src>

<mosaic_0001>
module attributes {stable_mosaic.version = 11 : i64} {
  func.func @_gap_kernel_single(%arg0: i32, %arg1: memref<8x256xf32, #tpu.memory_space<vmem>>, %arg2: memref<8x1xf32, #tpu.memory_space<vmem>>) attributes {dimension_semantics = [#tpu.dimension_semantics<parallel>], iteration_bounds = array<i64: 1>, scalar_prefetch = 0 : i64, scratch_operands = 0 : i64, tpu.core_type = #tpu.core_type<tc>, window_params = [{transform_indices = @transform_0, window_bounds = array<i64: 8, 256>}, {transform_indices = @transform_1, window_bounds = array<i64: 8, 1>}]} {
    %c0 = arith.constant 0 : index
    %c0_0 = arith.constant 0 : index
    %0 = vector.load %arg1[%c0, %c0_0] : memref<8x256xf32, #tpu.memory_space<vmem>>, vector<8x256xf32>
    %cst = arith.constant dense<0.000000e+00> : vector<8xf32>
    %1 = vector.multi_reduction <add>, %0, %cst [1] : vector<8x256xf32> to vector<8xf32>
    %2 = vector.shape_cast %1 : vector<8xf32> to vector<8x1xf32>
    %cst_1 = arith.constant 3.906250e-03 : f32
    %3 = vector.broadcast %cst_1 : f32 to vector<8x1xf32>
    %4 = arith.mulf %2, %3 : vector<8x1xf32>
    %c0_2 = arith.constant 0 : index
    %c0_3 = arith.constant 0 : index
    %5 = vector.load %arg2[%c0_2, %c0_3] : memref<8x1xf32, #tpu.memory_space<vmem>>, vector<8x1xf32>
    tpu.vector_store %arg2[%c0_2, %c0_3], %4 {strides = array<i32>} : memref<8x1xf32, #tpu.memory_space<vmem>>, vector<8x1xf32>,
    return
  }
  func.func @transform_0(%arg0: i32) -> (i32, i32) {
    %c0_i32 = arith.constant 0 : i32
    %c0_i32_0 = arith.constant 0 : i32
    return %arg0, %c0_i32 : i32, i32
  }
  func.func @transform_1(%arg0: i32) -> (i32, i32) {
    %c0_i32 = arith.constant 0 : i32
    %c0_i32_0 = arith.constant 0 : i32
    return %arg0, %c0_i32 : i32, i32
  }
}

</mosaic_0001>

<llo_original>
// kernel: tpu_custom_call.1
$region0: #{tpu_custom_call.1}
  #allocation0 [shape = 'u32[]', space=smem, size = 0x4, offset = 0x4, fixed_abs, tag = 'smem constant byte address 0x4 - core index']
  #allocation1 [shape = 'u32[72,128]{1,0:T(1,128)}', space=vmem, size = 0x9000, scoped, tag = 'internal scratch']
  %s0 = inlined_call_operand.hbm [shape: f32[8,256], index: 0, kind: input, shape index: {}]
  %s1 = inlined_call_operand.vmem [shape: f32[8,1], index: 1, kind: output, shape index: {}]
  %s2 = sld [smem:[#allocation0]]
  $region18: #{tpu_custom_call.1} parent=0
    _
  %s4 = ssub.s32 1, %s2
  %s5 = scalar_select 0, %s4, %s2
  $region1: #{tpu_custom_call.1} parent=0
    #allocation2 [shape = 'u8[8192]{0}', space=vmem, size = 0x2000, scoped, tag = 'input window, operand 0, single buffered']
    #allocation3 [shape = 's32[1]{0}', space=sflag, size = 0x4, scoped, tag = 'scoped memory for tpu_custom_call.1']
    %6 = vsyncpa [#allocation3], 0
    // Predicated region
    $region2: #{tpu_custom_call.1} parent=1 // pred_check
      _
    $region3: #{tpu_custom_call.1} parent=1 // pred_check_branch
      %8 = sbr.rel (0) target = $region5
    $region4: #{tpu_custom_call.1} parent=1 // pred_region
      %10 = vsyncadd [#allocation3], 0
      %s12 = sshll.u32 %s0, 4
      %s13 = int_to_ptr.hbm [resolvable:$true] %s12
      %s14 = sshll.u32 [#allocation2], 4
      %s15 = int_to_ptr.vmem [resolvable:$true] %s14
      %17 = dma.hbm_to_vmem [thread:$0]  %s13, 256, %s15, [#allocation3]
    $region5: #{tpu_custom_call.1} parent=1 // pred_fallthru
      _
    // Predicated region
    $region6: #{tpu_custom_call.1} parent=1 // pred_check
      _
    $region7: #{tpu_custom_call.1} parent=1 // pred_check_branch
      %19 = sbr.rel (0) target = $region9
    $region8: #{tpu_custom_call.1} parent=1 // pred_region
      %21 = dma.done [#allocation3], 256
    $region9: #{tpu_custom_call.1} parent=1 // pred_fallthru
      _
    %v22 = vld [vmem:[#allocation2] sm:$0xff]
    %v23 = vld [vmem:[#allocation2 + $0x8] sm:$0xff]
    %v24 = vadd.f32 %v22, %v23
    %25 = vadd.xlane.f32.xlu0 %v24
    %v26 = vpop.xlane.xlu0 %25
    %v27 = vmul.f32 %v26, 0.00390625
    %vm28 = vcmask 7168
    %29 = vst.msk [vmem:[%s1] sm:$0xff] %vm28, %v27
    // Predicated region
    $region10: #{tpu_custom_call.1} parent=1 // pred_check
      _
    $region11: #{tpu_custom_call.1} parent=1 // pred_check_branch
      %31 = sbr.rel (0) target = $region13
    $region12: #{tpu_custom_call.1} parent=1 // pred_region
      _
    $region13: #{tpu_custom_call.1} parent=1 // pred_fallthru
      _
    // Predicated region
    $region14: #{tpu_custom_call.1} parent=1 // pred_check
      _
    $region15: #{tpu_custom_call.1} parent=1 // pred_check_branch
      %33 = sbr.rel (0) target = $region17
    $region16: #{tpu_custom_call.1} parent=1 // pred_region
      _
    $region17: #{tpu_custom_call.1} parent=1 // pred_fallthru
      _
    %34 = vsyncpa [#allocation3], 1

</llo_original>
